<compile_context>
chip_gen: v6e
topology: v6e:2x2x1
jax: 0.10.0
libtpu: 0.0.40
codegen_flags: <defaults>
</compile_context>

<pallas_src>
import functools

import jax
import jax.numpy as jnp
from jax.experimental import pallas as pl
from jax.experimental.pallas import tpu as pltpu

EPS = 1e-10  # torch adds this inside the log; removed via the log-softmax identity.


def _round_up(v: int, m: int) -> int:
    return ((v + m - 1) // m) * m


def _confusion_loss_kernel(xt_ref, o_ref, *, inv_c: float):
    # xt_ref block: (C, TN) -- classes on sublanes, batch on lanes (lane-dense).
    x = xt_ref[...].astype(jnp.float32)

    m = jnp.max(x, axis=0, keepdims=True)                  # (1, TN)  XLU sublane reduce
    xm = x - m                                             # (C, TN)  VPU
    denom = jnp.sum(jnp.exp(xm), axis=0, keepdims=True)    # (1, TN)  EUP exp + XLU reduce
    sum_xm = jnp.sum(xm, axis=0, keepdims=True)            # (1, TN)

    # -norm = log(denom) - sum(x - m)/C   (log-softmax sum identity, eps dropped)
    o_ref[...] = jnp.log(denom) - sum_xm * jnp.float32(inv_c)


def confusion_loss(x, target=None, *, reduction: str = "mean", block_n: int = 8192):
    """Pallas TPU implementation of confusion_loss.forward. `target` is ignored."""
    del target
    if reduction not in ("none", "sum", "mean"):
        # Matches PyTorch: any other reduction -> `loss` is never assigned (error).
        raise ValueError(f"unsupported reduction: {reduction!r}")

    n, c = x.shape

    # Lane-dense working layout (C, N); pad N up to a multiple of the block
    # width (itself a multiple of 128) so every block is full lane width.
    tn = min(block_n, _round_up(n, 128))
    n_pad = _round_up(n, tn)
    num_blocks = n_pad // tn

    xt = jnp.transpose(x)                                  # (C, N)
    if n_pad != n:
        xt = jnp.pad(xt, ((0, 0), (0, n_pad - n)))         # padded cols sliced off below

    kernel = functools.partial(_confusion_loss_kernel, inv_c=1.0 / c)

    out = pl.pallas_call(
        kernel,
        out_shape=jax.ShapeDtypeStruct((1, n_pad), jnp.float32),
        grid_spec=pltpu.PrefetchScalarGridSpec(
            num_scalar_prefetch=0,
            grid=(num_blocks,),
            in_specs=[pl.BlockSpec((c, tn), lambda i: (0, i))],
            out_specs=pl.BlockSpec((1, tn), lambda i: (0, i)),
        ),
        compiler_params=pltpu.CompilerParams(
            dimension_semantics=("parallel",)),
    )(xt)

    per_row = out[0, :n]                                   # == -norm, shape (N,)
    if reduction == "none":
        return per_row.astype(x.dtype)
    total = jnp.sum(per_row)
    if reduction == "sum":
        return total.astype(x.dtype)
    return (total / n).astype(x.dtype)                     # 'mean'


def _reference(x, reduction):
    # Literal port of the torch module (softmax + eps inside the log).
    xf = x.astype(jnp.float32)
    p = jax.nn.softmax(xf, axis=1)
    log = jnp.log(p + EPS)
    norm = jnp.sum(log, axis=1) / x.shape[1]
    if reduction == "sum":
        return -jnp.sum(norm, axis=-1)
    if reduction == "mean":
        return -jnp.mean(norm)
    return -norm


if __name__ == "__main__":
    key = jax.random.PRNGKey(0)
    kx1, kx2, kt = jax.random.split(key, 3)

    # Nominal domain-classifier logits: batch=8, num_domains=16.
    x_small = jax.random.normal(kx1, (8, 16), dtype=jnp.float32)
    # Larger batch (not a multiple of 128) with a small block to exercise the
    # multi-block parallel grid and the padding path.
    x_big = jax.random.normal(kx2, (300, 16), dtype=jnp.float32)
    target = jax.random.randint(kt, (8,), 0, 16)  # unused, as in the torch module

    ok = True
    for name, xv, bn in (("small", x_small, 8192), ("big", x_big, 128)):
        for red in ("mean", "sum", "none"):
            out = confusion_loss(xv, target, reduction=red, block_n=bn)
            out = jax.block_until_ready(out)
            ref = _reference(xv, red)
            if not jnp.allclose(out, ref, atol=1e-5, rtol=1e-5):
                ok = False
                print(f"MISMATCH case={name} reduction={red}: {out} vs {ref}")

    if ok:
        print("KERNEL_OK")
</pallas_src>

<mosaic_0001>
module attributes {stable_mosaic.version = 11 : i64} {
  func.func @_confusion_loss_kernel(%arg0: i32, %arg1: memref<16x128xf32, #tpu.memory_space<vmem>>, %arg2: memref<1x128xf32, #tpu.memory_space<vmem>>) attributes {dimension_semantics = [#tpu.dimension_semantics<parallel>], iteration_bounds = array<i64: 1>, scalar_prefetch = 0 : i64, scratch_operands = 0 : i64, tpu.core_type = #tpu.core_type<tc>, window_params = [{transform_indices = @transform_0, window_bounds = array<i64: 16, 128>}, {transform_indices = @transform_1, window_bounds = array<i64: 1, 128>}]} {
    %c0 = arith.constant 0 : index
    %c0_0 = arith.constant 0 : index
    %0 = vector.load %arg1[%c0, %c0_0] : memref<16x128xf32, #tpu.memory_space<vmem>>, vector<16x128xf32>
    %cst = arith.constant dense<0xFF800000> : vector<128xf32>
    %1 = vector.multi_reduction <maximumf>, %0, %cst [0] : vector<16x128xf32> to vector<128xf32>
    %2 = vector.shape_cast %1 : vector<128xf32> to vector<1x128xf32>
    %3 = vector.broadcast %2 : vector<1x128xf32> to vector<16x128xf32>
    %4 = arith.subf %0, %3 : vector<16x128xf32>
    %5 = math.exp %4 : vector<16x128xf32>
    %cst_1 = arith.constant dense<0.000000e+00> : vector<128xf32>
    %6 = vector.multi_reduction <add>, %5, %cst_1 [0] : vector<16x128xf32> to vector<128xf32>
    %7 = vector.shape_cast %6 : vector<128xf32> to vector<1x128xf32>
    %cst_2 = arith.constant dense<0.000000e+00> : vector<128xf32>
    %8 = vector.multi_reduction <add>, %4, %cst_2 [0] : vector<16x128xf32> to vector<128xf32>
    %9 = vector.shape_cast %8 : vector<128xf32> to vector<1x128xf32>
    %10 = math.log %7 : vector<1x128xf32>
    %cst_3 = arith.constant 6.250000e-02 : f32
    %11 = vector.broadcast %cst_3 : f32 to vector<1x128xf32>
    %12 = arith.mulf %9, %11 : vector<1x128xf32>
    %13 = arith.subf %10, %12 : vector<1x128xf32>
    %c0_4 = arith.constant 0 : index
    %c0_5 = arith.constant 0 : index
    %14 = vector.load %arg2[%c0_4, %c0_5] : memref<1x128xf32, #tpu.memory_space<vmem>>, vector<1x128xf32>
    tpu.vector_store %arg2[%c0_4, %c0_5], %13 {strides = array<i32>} : memref<1x128xf32, #tpu.memory_space<vmem>>, vector<1x128xf32>,
    return
  }
  func.func @transform_0(%arg0: i32) -> (i32, i32) {
    %c0_i32 = arith.constant 0 : i32
    %c0_i32_0 = arith.constant 0 : i32
    return %c0_i32, %arg0 : i32, i32
  }
  func.func @transform_1(%arg0: i32) -> (i32, i32) {
    %c0_i32 = arith.constant 0 : i32
    %c0_i32_0 = arith.constant 0 : i32
    return %c0_i32, %arg0 : i32, i32
  }
}

</mosaic_0001>

<llo_original>
// kernel: tpu_custom_call.1
$region0: #{tpu_custom_call.1}
  #allocation0 [shape = 'u32[]', space=smem, size = 0x4, offset = 0x4, fixed_abs, tag = 'smem constant byte address 0x4 - core index']
  #allocation1 [shape = 'u32[144,128]{1,0:T(1,128)}', space=vmem, size = 0x12000, scoped, tag = 'internal scratch']
  %s0 = inlined_call_operand.hbm [shape: f32[16,128], index: 0, kind: input, shape index: {}]
  %s1 = inlined_call_operand.hbm [shape: f32[1,128], index: 1, kind: output, shape index: {}]
  %s2 = sld [smem:[#allocation0]]
  $region18: #{tpu_custom_call.1} parent=0
    _
  %s4 = ssub.s32 1, %s2
  %s5 = scalar_select 0, %s4, %s2
  $region1: #{tpu_custom_call.1} parent=0
    #allocation2 [shape = 'u8[8192]{0}', space=vmem, size = 0x2000, scoped, tag = 'input window, operand 0, single buffered']
    #allocation3 [shape = 's32[1]{0}', space=sflag, size = 0x4, scoped, tag = 'scoped memory for tpu_custom_call.1']
    #allocation4 [shape = 's32[1]{0}', space=sflag, size = 0x4, scoped, tag = 'scoped memory for tpu_custom_call.1']
    #allocation5 [shape = 'u8[512]{0}', space=vmem, size = 0x400, scoped, tag = 'output window, operand 0, single buffered']
    %6 = vsyncpa [#allocation3], 0
    %7 = vsyncpa [#allocation4], 0
    // Predicated region
    $region2: #{tpu_custom_call.1} parent=1 // pred_check
      _
    $region3: #{tpu_custom_call.1} parent=1 // pred_check_branch
      %9 = sbr.rel (0) target = $region5
    $region4: #{tpu_custom_call.1} parent=1 // pred_region
      %s11 = ssub.s32 256, 256
      %12 = vsyncadd [#allocation3], %s11
      %s13 = sshll.u32 [#allocation2], 4
      %s14 = int_to_ptr.vmem [resolvable:$true] %s13
      %19 = dma.hbm_to_vmem [thread:$0]  %s0, 256, %s14, [#allocation3], 128, 128, 8
    $region5: #{tpu_custom_call.1} parent=1 // pred_fallthru
      _
    // Predicated region
    $region6: #{tpu_custom_call.1} parent=1 // pred_check
      _
    $region7: #{tpu_custom_call.1} parent=1 // pred_check_branch
      %21 = sbr.rel (0) target = $region9
    $region8: #{tpu_custom_call.1} parent=1 // pred_region
      %22 = dma.done [#allocation3], 256
    $region9: #{tpu_custom_call.1} parent=1 // pred_fallthru
      _
    %v23 = vld [vmem:[#allocation2] sm:$0xff]
    %v24 = vld [vmem:[#allocation2 + $0x8] sm:$0xff]
    %v25 = vmax.f32 %v23, %v24
    %v26 = vrot.slane %v25, 4
    %v27 = vmax.f32 %v25, %v26
    %v28 = vrot.slane %v27, 2
    %v29 = vmax.f32 %v27, %v28
    %v30 = vrot.slane %v29, 1
    %v31 = vmax.f32 %v29, %v30
    %v32 = vsub.f32 %v23, %v31
    %v33 = vsub.f32 %v24, %v31
    %v34 = vmul.f32 %v32, 1.442695
    %v35 = vpow.pop %v34
    %v36 = vmul.f32 %v33, 1.442695
    %v37 = vpow.pop %v36
    %v38 = vadd.f32 %v35, %v37
    %v39 = vrot.slane %v38, 4
    %v40 = vadd.f32 %v38, %v39
    %v41 = vrot.slane %v40, 2
    %v42 = vadd.f32 %v40, %v41
    %v43 = vrot.slane %v42, 1
    %v44 = vadd.f32 %v42, %v43
    %v45 = vadd.f32 %v32, %v33
    %v46 = vrot.slane %v45, 4
    %v47 = vadd.f32 %v45, %v46
    %v48 = vrot.slane %v47, 2
    %v49 = vadd.f32 %v47, %v48
    %v50 = vrot.slane %v49, 1
    %v51 = vadd.f32 %v49, %v50
    %v52 = vlog2.pop %v44
    %v53 = vmul.f32 %v52, 0.6931472
    %v54 = vmul.f32 %v51, 0.0625
    %v55 = vsub.f32 %v53, %v54
    %56 = vst [vmem:[#allocation5] sm:$0x1] %v55
    // Predicated region
    $region10: #{tpu_custom_call.1} parent=1 // pred_check
      _
    $region11: #{tpu_custom_call.1} parent=1 // pred_check_branch
      %58 = sbr.rel (0) target = $region13
    $region12: #{tpu_custom_call.1} parent=1 // pred_region
      %s60 = ssub.s32 16, 16
      %61 = vsyncadd [#allocation4], %s60
      %s63 = sshll.u32 [#allocation5], 4
      %s64 = int_to_ptr.vmem [resolvable:$true] %s63
      %66 = dma.vmem_to_hbm [thread:$0]  %s64, 16, %s1, [#allocation4]
    $region13: #{tpu_custom_call.1} parent=1 // pred_fallthru
      _
    // Predicated region
    $region14: #{tpu_custom_call.1} parent=1 // pred_check
      _
    $region15: #{tpu_custom_call.1} parent=1 // pred_check_branch
      %68 = sbr.rel (0) target = $region17
    $region16: #{tpu_custom_call.1} parent=1 // pred_region
      %69 = dma.done [#allocation4], 16
    $region17: #{tpu_custom_call.1} parent=1 // pred_fallthru
      _
    %70 = vsyncpa [#allocation3], 1
    %71 = vsyncpa [#allocation4], 1

</llo_original>
